<compile_context>
chip_gen: v6e
topology: v6e:2x2x1
jax: 0.10.0
libtpu: 0.0.40
codegen_flags: <defaults>
</compile_context>

<pallas_src>
from functools import partial

import jax
import jax.numpy as jnp
from jax import lax
from jax.experimental import pallas as pl
from jax.experimental.pallas import tpu as pltpu


# ----------------------------- Pallas kernel ------------------------------ #
def fused_mbconv_kernel(p_ref, w1_ref, b1_ref, w2_ref, b2_ref, o_ref, *,
                        res_start, res_size):
    # p_ref:  (KK*Cin, HW)   channel-major im2col patches, HW on the lane axis
    # w1_ref: (Cexp, KK*Cin) folded (BN1 scale * conv3x3)
    # b1_ref: (Cexp, 1)      folded BN1 bias
    # w2_ref: (Cout, Cexp)   folded (BN2 scale * conv1x1)
    # b2_ref: (Cout, 1)      folded BN2 bias
    # o_ref:  (Cout, HW)
    p = p_ref[...]

    # expand conv (3x3) folded with BN1, then SiLU
    h = jnp.dot(w1_ref[...], p, preferred_element_type=jnp.float32) + b1_ref[...]
    h = h * jax.nn.sigmoid(h)                              # SiLU

    # project conv (1x1) folded with BN2 (activation = Identity)
    y = jnp.dot(w2_ref[...], h, preferred_element_type=jnp.float32) + b2_ref[...]

    # shortcut: residual == centre im2col tap (static slice, no extra DMA stream)
    # drop_path is the identity in eval mode.
    y = y + p[res_start:res_start + res_size, :]
    o_ref[...] = y.astype(o_ref.dtype)


# ------------------------------- wrapper ---------------------------------- #
def fused_mbconv_pallas(x_nchw, params):
    """x_nchw: (N, Cin, H, W) float32 -> (N, Cout, H, W) float32."""
    w1t, b1, w2t, b2 = params["w1t"], params["b1"], params["w2t"], params["b2"]
    N, Cin, H, W = x_nchw.shape
    Cexp, KK_Cin = w1t.shape
    Cout = w2t.shape[0]
    K = 3
    HW = H * W

    # im2col glue (plain JAX), channel-major: pad=1, stride=1, 3x3 taps
    # -> (N, K*K*Cin, HW) with tap-major / cin-minor row order (matches w1t).
    xpad = jnp.pad(x_nchw, ((0, 0), (0, 0), (1, 1), (1, 1)))
    taps = [xpad[:, :, kh:kh + H, kw:kw + W]
            for kh in range(K) for kw in range(K)]
    patches = jnp.concatenate(taps, axis=1).reshape(N, K * K * Cin, HW)

    center = (K * K) // 2                                  # centre tap (1, 1)
    kernel = partial(fused_mbconv_kernel,
                     res_start=center * Cin, res_size=Cin)

    out = pl.pallas_call(
        kernel,
        out_shape=jax.ShapeDtypeStruct((N, Cout, HW), jnp.float32),
        grid_spec=pltpu.PrefetchScalarGridSpec(
            num_scalar_prefetch=0,
            grid=(N,),
            in_specs=[
                # leading batch dim squeezed out of the kernel view
                pl.BlockSpec((None, KK_Cin, HW), lambda n: (n, 0, 0)),
                pl.BlockSpec((Cexp, KK_Cin), lambda n: (0, 0)),
                pl.BlockSpec((Cexp, 1), lambda n: (0, 0)),
                pl.BlockSpec((Cout, Cexp), lambda n: (0, 0)),
                pl.BlockSpec((Cout, 1), lambda n: (0, 0)),
            ],
            out_specs=pl.BlockSpec((None, Cout, HW), lambda n: (n, 0, 0)),
        ),
        compiler_params=pltpu.CompilerParams(
            dimension_semantics=("parallel",)),
    )(patches, w1t, b1, w2t, b2)

    # (N, Cout, HW) is already channel-major -> NCHW via a free reshape.
    return out.reshape(N, Cout, H, W)


# ------------------------ parameter construction -------------------------- #
def make_params(key, input_c=4, output_c=4, expand_ratio=4, kernel_s=3,
                eps=1e-5):
    expand_c = input_c * expand_ratio
    ks = jax.random.split(key, 10)

    # conv1: (Cexp, Cin, K, K), no bias  (PyTorch OIHW)
    w1 = 0.1 * jax.random.normal(ks[0], (expand_c, input_c, kernel_s, kernel_s),
                                 jnp.float32)
    # BN1 params (eval mode running stats)
    g1 = 1.0 + 0.1 * jax.random.normal(ks[1], (expand_c,), jnp.float32)
    be1 = 0.1 * jax.random.normal(ks[2], (expand_c,), jnp.float32)
    m1 = 0.1 * jax.random.normal(ks[3], (expand_c,), jnp.float32)
    v1 = 1.0 + 0.1 * jnp.abs(jax.random.normal(ks[4], (expand_c,), jnp.float32))

    # conv2: (Cout, Cexp, 1, 1), no bias
    w2 = 0.1 * jax.random.normal(ks[5], (output_c, expand_c, 1, 1), jnp.float32)
    g2 = 1.0 + 0.1 * jax.random.normal(ks[6], (output_c,), jnp.float32)
    be2 = 0.1 * jax.random.normal(ks[7], (output_c,), jnp.float32)
    m2 = 0.1 * jax.random.normal(ks[8], (output_c,), jnp.float32)
    v2 = 1.0 + 0.1 * jnp.abs(jax.random.normal(ks[9], (output_c,), jnp.float32))

    # Fold BN (eval) into conv weights/bias -- channel-major ("transposed").
    s1 = g1 / jnp.sqrt(v1 + eps)                           # (Cexp,)
    # OIHW -> (Cexp, K, K, Cin) -> (Cexp, K*K*Cin): tap-major / cin-minor cols,
    # matching the im2col row order in the wrapper.
    w1t = jnp.transpose(w1, (0, 2, 3, 1)).reshape(
        expand_c, kernel_s * kernel_s * input_c) * s1[:, None]
    b1 = (be1 - m1 * s1)[:, None]                          # (Cexp, 1)

    s2 = g2 / jnp.sqrt(v2 + eps)                           # (Cout,)
    w2t = w2[:, :, 0, 0] * s2[:, None]                     # (Cout, Cexp)
    b2 = (be2 - m2 * s2)[:, None]                          # (Cout, 1)

    raw = dict(w1=w1, g1=g1, be1=be1, m1=m1, v1=v1,
               w2=w2, g2=g2, be2=be2, m2=m2, v2=v2, eps=eps)
    return dict(w1t=w1t, b1=b1, w2t=w2t, b2=b2, raw=raw)


# ---------------------------- pure-JAX reference --------------------------- #
def fused_mbconv_reference(x, params):
    r = params["raw"]
    eps = r["eps"]
    y = lax.conv_general_dilated(x, r["w1"], (1, 1), "SAME",
                                 dimension_numbers=("NCHW", "OIHW", "NCHW"))
    y = (y - r["m1"][None, :, None, None]) / jnp.sqrt(
        r["v1"] + eps)[None, :, None, None] * r["g1"][None, :, None, None] \
        + r["be1"][None, :, None, None]
    y = y * jax.nn.sigmoid(y)                              # SiLU
    y = lax.conv_general_dilated(y, r["w2"], (1, 1), "SAME",
                                 dimension_numbers=("NCHW", "OIHW", "NCHW"))
    y = (y - r["m2"][None, :, None, None]) / jnp.sqrt(
        r["v2"] + eps)[None, :, None, None] * r["g2"][None, :, None, None] \
        + r["be2"][None, :, None, None]
    return y + x                                           # shortcut (eval: no drop)


# ----------------------------------- main ---------------------------------- #
if __name__ == "__main__":
    key = jax.random.PRNGKey(0)
    k_x, k_p = jax.random.split(key)

    N, Cin, H, W = 2, 4, 16, 16
    x = jax.random.normal(k_x, (N, Cin, H, W), jnp.float32)
    params = make_params(k_p, input_c=Cin, output_c=Cin, expand_ratio=4,
                         kernel_s=3)

    out = fused_mbconv_pallas(x, params)
    out = jax.block_until_ready(out)

    ref = jax.block_until_ready(fused_mbconv_reference(x, params))
    assert out.shape == (N, Cin, H, W)
    assert jnp.allclose(out, ref, atol=1e-4, rtol=1e-4), \
        f"max abs err {jnp.max(jnp.abs(out - ref))}"

    print("KERNEL_OK")
</pallas_src>

<mosaic_0001>
module attributes {stable_mosaic.version = 11 : i64} {
  func.func @fused_mbconv_kernel(%arg0: i32, %arg1: memref<1x36x256xf32, #tpu.memory_space<vmem>>, %arg2: memref<16x36xf32, #tpu.memory_space<vmem>>, %arg3: memref<16x1xf32, #tpu.memory_space<vmem>>, %arg4: memref<4x16xf32, #tpu.memory_space<vmem>>, %arg5: memref<4x1xf32, #tpu.memory_space<vmem>>, %arg6: memref<1x4x256xf32, #tpu.memory_space<vmem>>) attributes {dimension_semantics = [#tpu.dimension_semantics<parallel>], iteration_bounds = array<i64: 2>, scalar_prefetch = 0 : i64, scratch_operands = 0 : i64, tpu.core_type = #tpu.core_type<tc>, window_params = [{transform_indices = @transform_0, window_bounds = array<i64: 1, 36, 256>}, {pipeline_mode = #tpu.pipeline_mode<synchronous>, transform_indices = @transform_1, window_bounds = array<i64: 16, 36>}, {pipeline_mode = #tpu.pipeline_mode<synchronous>, transform_indices = @transform_2, window_bounds = array<i64: 16, 1>}, {pipeline_mode = #tpu.pipeline_mode<synchronous>, transform_indices = @transform_3, window_bounds = array<i64: 4, 16>}, {pipeline_mode = #tpu.pipeline_mode<synchronous>, transform_indices = @transform_4, window_bounds = array<i64: 4, 1>}, {transform_indices = @transform_5, window_bounds = array<i64: 1, 4, 256>}]} {
    %c0 = arith.constant 0 : index
    %c0_0 = arith.constant 0 : index
    %c0_1 = arith.constant 0 : index
    %0 = vector.load %arg1[%c0, %c0_0, %c0_1] : memref<1x36x256xf32, #tpu.memory_space<vmem>>, vector<1x36x256xf32>
    %1 = vector.shape_cast %0 : vector<1x36x256xf32> to vector<36x256xf32>
    %c0_2 = arith.constant 0 : index
    %c0_3 = arith.constant 0 : index
    %2 = vector.load %arg2[%c0_2, %c0_3] : memref<16x36xf32, #tpu.memory_space<vmem>>, vector<16x36xf32>
    %cst = arith.constant dense<0.000000e+00> : vector<16x256xf32>
    %3 = tpu.matmul %2, %1, %cst {dimension_numbers = #tpu.dot_dimension_numbers<[1], [0], [0], [1], [0, 0, 1, 1], [], []>} : vector<16x36xf32>, vector<36x256xf32>, vector<16x256xf32> -> vector<16x256xf32>
    %c0_4 = arith.constant 0 : index
    %c0_5 = arith.constant 0 : index
    %4 = vector.load %arg3[%c0_4, %c0_5] : memref<16x1xf32, #tpu.memory_space<vmem>>, vector<16x1xf32>
    %5 = vector.broadcast %4 : vector<16x1xf32> to vector<16x256xf32>
    %6 = arith.addf %3, %5 : vector<16x256xf32>
    %7 = arith.negf %6 : vector<16x256xf32>
    %8 = math.exp %7 : vector<16x256xf32>
    %cst_6 = arith.constant 1.000000e+00 : f32
    %9 = vector.broadcast %cst_6 : f32 to vector<16x256xf32>
    %10 = arith.addf %9, %8 : vector<16x256xf32>
    %11 = arith.divf %9, %10 : vector<16x256xf32>
    %12 = arith.mulf %6, %11 : vector<16x256xf32>
    %c0_7 = arith.constant 0 : index
    %c0_8 = arith.constant 0 : index
    %13 = vector.load %arg4[%c0_7, %c0_8] : memref<4x16xf32, #tpu.memory_space<vmem>>, vector<4x16xf32>
    %cst_9 = arith.constant dense<0.000000e+00> : vector<4x256xf32>
    %14 = tpu.matmul %13, %12, %cst_9 {dimension_numbers = #tpu.dot_dimension_numbers<[1], [0], [0], [1], [0, 0, 1, 1], [], []>} : vector<4x16xf32>, vector<16x256xf32>, vector<4x256xf32> -> vector<4x256xf32>
    %c0_10 = arith.constant 0 : index
    %c0_11 = arith.constant 0 : index
    %15 = vector.load %arg5[%c0_10, %c0_11] : memref<4x1xf32, #tpu.memory_space<vmem>>, vector<4x1xf32>
    %16 = vector.broadcast %15 : vector<4x1xf32> to vector<4x256xf32>
    %17 = arith.addf %14, %16 : vector<4x256xf32>
    %18 = vector.extract_strided_slice %1 {offsets = [16, 0], sizes = [4, 256], strides = [1, 1]} : vector<36x256xf32> to vector<4x256xf32>
    %19 = arith.addf %17, %18 : vector<4x256xf32>
    %c0_12 = arith.constant 0 : index
    %c0_13 = arith.constant 0 : index
    %c0_14 = arith.constant 0 : index
    %20 = vector.load %arg6[%c0_12, %c0_13, %c0_14] : memref<1x4x256xf32, #tpu.memory_space<vmem>>, vector<1x4x256xf32>
    %21 = vector.shape_cast %20 : vector<1x4x256xf32> to vector<4x256xf32>
    %22 = vector.shape_cast %19 : vector<4x256xf32> to vector<1x4x256xf32>
    tpu.vector_store %arg6[%c0_12, %c0_13, %c0_14], %22 {strides = array<i32>} : memref<1x4x256xf32, #tpu.memory_space<vmem>>, vector<1x4x256xf32>,
    return
  }
  func.func @transform_0(%arg0: i32) -> (i32, i32, i32) {
    %c0_i32 = arith.constant 0 : i32
    %c0_i32_0 = arith.constant 0 : i32
    %c0_i32_1 = arith.constant 0 : i32
    return %arg0, %c0_i32, %c0_i32_0 : i32, i32, i32
  }
  func.func @transform_1(%arg0: i32) -> (i32, i32) {
    %c0_i32 = arith.constant 0 : i32
    %c0_i32_0 = arith.constant 0 : i32
    %c0_i32_1 = arith.constant 0 : i32
    return %c0_i32, %c0_i32_0 : i32, i32
  }
  func.func @transform_2(%arg0: i32) -> (i32, i32) {
    %c0_i32 = arith.constant 0 : i32
    %c0_i32_0 = arith.constant 0 : i32
    %c0_i32_1 = arith.constant 0 : i32
    return %c0_i32, %c0_i32_0 : i32, i32
  }
  func.func @transform_3(%arg0: i32) -> (i32, i32) {
    %c0_i32 = arith.constant 0 : i32
    %c0_i32_0 = arith.constant 0 : i32
    %c0_i32_1 = arith.constant 0 : i32
    return %c0_i32, %c0_i32_0 : i32, i32
  }
  func.func @transform_4(%arg0: i32) -> (i32, i32) {
    %c0_i32 = arith.constant 0 : i32
    %c0_i32_0 = arith.constant 0 : i32
    %c0_i32_1 = arith.constant 0 : i32
    return %c0_i32, %c0_i32_0 : i32, i32
  }
  func.func @transform_5(%arg0: i32) -> (i32, i32, i32) {
    %c0_i32 = arith.constant 0 : i32
    %c0_i32_0 = arith.constant 0 : i32
    %c0_i32_1 = arith.constant 0 : i32
    return %arg0, %c0_i32, %c0_i32_0 : i32, i32, i32
  }
}

</mosaic_0001>

<llo_original>
// kernel: tpu_custom_call.1
$region0: #{tpu_custom_call.1}
  #allocation0 [shape = 'u32[]', space=smem, size = 0x4, offset = 0x4, fixed_abs, tag = 'smem constant byte address 0x4 - core index']
  #allocation1 [shape = 'u32[144,128]{1,0:T(1,128)}', space=vmem, size = 0x12000, scoped, tag = 'internal scratch']
  %s0 = inlined_call_operand.vmem [shape: f32[2,36,256], index: 0, kind: input, shape index: {}]
  %s1 = inlined_call_operand.vmem [shape: f32[16,36], index: 1, kind: input, shape index: {}]
  %s2 = inlined_call_operand.vmem [shape: f32[16,1], index: 2, kind: input, shape index: {}]
  %s3 = inlined_call_operand.vmem [shape: f32[4,16], index: 3, kind: input, shape index: {}]
  %s4 = inlined_call_operand.vmem [shape: f32[4,1], index: 4, kind: input, shape index: {}]
  %s5 = inlined_call_operand.hbm [shape: f32[2,4,256], index: 5, kind: output, shape index: {}]
  %s6 = sld [smem:[#allocation0]]
  $region53: #{tpu_custom_call.1} parent=0
    _
  %s8 = ssub.s32 1, %s6
  %s9 = scalar_select 0, %s8, %s6
  $region1: #{tpu_custom_call.1} parent=0
    #allocation2 [shape = 'u8[8192]{0}', space=vmem, size = 0x2000, scoped, tag = 'output window, operand 0']
    #allocation3 [shape = 's32[2]{0}', space=sflag, size = 0x8, scoped, tag = 'scoped memory for tpu_custom_call.1']
    %10 = vsyncpa [#allocation3], 0
    %s11 = scalar_lea.sflag [#allocation3], 1
    %12 = vsyncpa %s11, 0
    loop: start=0, step=1, limit=4
    $region2: #{tpu_custom_call.1} parent=1 // loop_pre_header
      _
    $region3: #{tpu_custom_call.1} parent=1 // loop_header
      %s14 = sphi 0, %s18
      %p15 = scmp.ge.s32.totalorder %s14, 4
      %s24 = sphi 0, %s26
      %s27 = sphi 0, %s24
      %s28 = sphi 0, %s27
      %s44 = sphi 0, %s28
      %s48 = sphi 0, %s48
      %s50 = sphi 0, %s48
      %s51 = sphi 0, %s50
      %s65 = sphi 0, %s51
      %s69 = sphi 0, %s69
      %s71 = sphi 0, %s69
      %s72 = sphi 0, %s71
      %s86 = sphi 0, %s72
      %s90 = sphi 0, %s90
      %s92 = sphi 0, %s90
      %s93 = sphi 0, %s92
      %s107 = sphi 0, %s93
      %s111 = sphi 0, %s111
      %s113 = sphi 0, %s111
      %s114 = sphi 0, %s113
      %s128 = sphi 0, %s114
      %s134 = sphi 0, %s136
      %s137 = sphi 0, %s134
      %s138 = sphi 0, %s137
      %s154 = sphi 0, %s138
    $region4: #{tpu_custom_call.1} parent=1 // loop_header_branch
      %17 = sbr.rel (%p15) target = $region8
    $region5: #{tpu_custom_call.1} parent=1 // loop_body
      %s19 = ssub.s32 %s14, 1
      %s20 = ssub.s32 %s14, 2
      %s21 = sadd.s32 %s14, 1
      %s22 = ssub.s32 %s14, %s21
      %p23 = scmp.eq.s32.totalorder %s22, 0
      %s25 = sadd.s32 %s24, 1
      %s26 = scalar_select %p23, %s24, %s25
      %p29 = pneg %p23
      %p30 = scmp.eq.s32.totalorder %s14, 1
      %p31 = por %p29, %p30
      %p32 = scmp.ne.s32.totalorder %s24, %s27
      %p33 = scmp.eq.s32.totalorder %s14, 0
      %p34 = por %p32, %p33
      %p35 = scmp.ne.s32.totalorder %s24, %s27
      %p36 = scmp.eq.s32.totalorder %s19, 1
      %p37 = por %p35, %p36
      %p38 = scmp.ne.s32.totalorder %s27, %s28
      %p39 = scmp.eq.s32.totalorder %s19, 0
      %p40 = por %p38, %p39
      %p41 = scmp.ne.s32.totalorder %s27, %s28
      %p42 = scmp.eq.s32.totalorder %s20, 1
      %p43 = por %p41, %p42
      %p45 = scmp.ne.s32.totalorder %s28, %s44
      %p46 = scmp.eq.s32.totalorder %s20, 0
      %p47 = por %p45, %p46
      %s49 = sadd.s32 %s48, 1
      %p52 = scmp.eq.s32.totalorder %s14, 1
      %p53 = scmp.ne.s32.totalorder %s48, %s50
      %p54 = scmp.eq.s32.totalorder %s14, 0
      %p55 = por %p53, %p54
      %p56 = scmp.ne.s32.totalorder %s48, %s50
      %p57 = scmp.eq.s32.totalorder %s19, 1
      %p58 = por %p56, %p57
      %p59 = scmp.ne.s32.totalorder %s50, %s51
      %p60 = scmp.eq.s32.totalorder %s19, 0
      %p61 = por %p59, %p60
      %p62 = scmp.ne.s32.totalorder %s50, %s51
      %p63 = scmp.eq.s32.totalorder %s20, 1
      %p64 = por %p62, %p63
      %p66 = scmp.ne.s32.totalorder %s51, %s65
      %p67 = scmp.eq.s32.totalorder %s20, 0
      %p68 = por %p66, %p67
      %s70 = sadd.s32 %s69, 1
      %p73 = scmp.eq.s32.totalorder %s14, 1
      %p74 = scmp.ne.s32.totalorder %s69, %s71
      %p75 = scmp.eq.s32.totalorder %s14, 0
      %p76 = por %p74, %p75
      %p77 = scmp.ne.s32.totalorder %s69, %s71
      %p78 = scmp.eq.s32.totalorder %s19, 1
      %p79 = por %p77, %p78
      %p80 = scmp.ne.s32.totalorder %s71, %s72
      %p81 = scmp.eq.s32.totalorder %s19, 0
      %p82 = por %p80, %p81
      %p83 = scmp.ne.s32.totalorder %s71, %s72
      %p84 = scmp.eq.s32.totalorder %s20, 1
      %p85 = por %p83, %p84
      %p87 = scmp.ne.s32.totalorder %s72, %s86
      %p88 = scmp.eq.s32.totalorder %s20, 0
      %p89 = por %p87, %p88
      %s91 = sadd.s32 %s90, 1
      %p94 = scmp.eq.s32.totalorder %s14, 1
      %p95 = scmp.ne.s32.totalorder %s90, %s92
      %p96 = scmp.eq.s32.totalorder %s14, 0
      %p97 = por %p95, %p96
      %p98 = scmp.ne.s32.totalorder %s90, %s92
      %p99 = scmp.eq.s32.totalorder %s19, 1
      %p100 = por %p98, %p99
      %p101 = scmp.ne.s32.totalorder %s92, %s93
      %p102 = scmp.eq.s32.totalorder %s19, 0
      %p103 = por %p101, %p102
      %p104 = scmp.ne.s32.totalorder %s92, %s93
      %p105 = scmp.eq.s32.totalorder %s20, 1
      %p106 = por %p104, %p105
      %p108 = scmp.ne.s32.totalorder %s93, %s107
      %p109 = scmp.eq.s32.totalorder %s20, 0
      %p110 = por %p108, %p109
      %s112 = sadd.s32 %s111, 1
      %p115 = scmp.eq.s32.totalorder %s14, 1
      %p116 = scmp.ne.s32.totalorder %s111, %s113
      %p117 = scmp.eq.s32.totalorder %s14, 0
      %p118 = por %p116, %p117
      %p119 = scmp.ne.s32.totalorder %s111, %s113
      %p120 = scmp.eq.s32.totalorder %s19, 1
      %p121 = por %p119, %p120
      %p122 = scmp.ne.s32.totalorder %s113, %s114
      %p123 = scmp.eq.s32.totalorder %s19, 0
      %p124 = por %p122, %p123
      %p125 = scmp.ne.s32.totalorder %s113, %s114
      %p126 = scmp.eq.s32.totalorder %s20, 1
      %p127 = por %p125, %p126
      %p129 = scmp.ne.s32.totalorder %s114, %s128
      %p130 = scmp.eq.s32.totalorder %s20, 0
      %p131 = por %p129, %p130
      %s132 = ssub.s32 %s14, %s21
      %p133 = scmp.eq.s32.totalorder %s132, 0
      %s135 = sadd.s32 %s134, 1
      %s136 = scalar_select %p133, %s134, %s135
      %p139 = pneg %p133
      %p140 = scmp.eq.s32.totalorder %s14, 1
      %p141 = por %p139, %p140
      %p142 = scmp.ne.s32.totalorder %s134, %s137
      %p143 = scmp.eq.s32.totalorder %s14, 0
      %p144 = por %p142, %p143
      %p145 = scmp.ne.s32.totalorder %s134, %s137
      %p146 = scmp.eq.s32.totalorder %s19, 1
      %p147 = por %p145, %p146
      %p148 = scmp.ne.s32.totalorder %s137, %s138
      %p149 = scmp.eq.s32.totalorder %s19, 0
      %p150 = por %p148, %p149
      %p151 = scmp.ne.s32.totalorder %s137, %s138
      %p152 = scmp.eq.s32.totalorder %s20, 1
      %p153 = por %p151, %p152
      %p155 = scmp.ne.s32.totalorder %s138, %s154
      %p156 = scmp.eq.s32.totalorder %s20, 0
      %p157 = por %p155, %p156
      %p158 = scmp.le.s32.totalorder 1, %s14
      %p159 = scmp.lt.s32.totalorder %s14, 3
      %p160 = pnand %p158, %p159
      %p161 = pneg %p160
      // Predicated region
      $region9: #{tpu_custom_call.1} parent=5 // pred_check
        _
      $region10: #{tpu_custom_call.1} parent=5 // pred_check_branch
        %163 = sbr.rel (%p160) target = $region12
      $region11: #{tpu_custom_call.1} parent=5 // pred_region
        %s164 = ssub.s32 %s14, 1
        // Predicated region
        $region13: #{tpu_custom_call.1} parent=11 // pred_check
          %p165 = pneg %p61
        $region14: #{tpu_custom_call.1} parent=11 // pred_check_branch
          %167 = sbr.rel (%p165) target = $region16
        $region15: #{tpu_custom_call.1} parent=11 // pred_region
          _
        $region16: #{tpu_custom_call.1} parent=11 // pred_fallthru
          _
        // Predicated region
        $region17: #{tpu_custom_call.1} parent=11 // pred_check
          %p168 = pneg %p82
        $region18: #{tpu_custom_call.1} parent=11 // pred_check_branch
          %170 = sbr.rel (%p168) target = $region20
        $region19: #{tpu_custom_call.1} parent=11 // pred_region
          _
        $region20: #{tpu_custom_call.1} parent=11 // pred_fallthru
          _
        // Predicated region
        $region21: #{tpu_custom_call.1} parent=11 // pred_check
          %p171 = pneg %p103
        $region22: #{tpu_custom_call.1} parent=11 // pred_check_branch
          %173 = sbr.rel (%p171) target = $region24
        $region23: #{tpu_custom_call.1} parent=11 // pred_region
          _
        $region24: #{tpu_custom_call.1} parent=11 // pred_fallthru
          _
        // Predicated region
        $region25: #{tpu_custom_call.1} parent=11 // pred_check
          %p174 = pneg %p124
        $region26: #{tpu_custom_call.1} parent=11 // pred_check_branch
          %176 = sbr.rel (%p174) target = $region28
        $region27: #{tpu_custom_call.1} parent=11 // pred_region
          _
        $region28: #{tpu_custom_call.1} parent=11 // pred_fallthru
          _
      $region12: #{tpu_custom_call.1} parent=5 // pred_fallthru
        _
      %p177 = scmp.lt.s32.totalorder %s14, 2
      // Predicated region
      $region29: #{tpu_custom_call.1} parent=5 // pred_check
        %p178 = pneg %p177
      $region30: #{tpu_custom_call.1} parent=5 // pred_check_branch
        %180 = sbr.rel (%p178) target = $region32
      $region31: #{tpu_custom_call.1} parent=5 // pred_region
        // Predicated region
        $region33: #{tpu_custom_call.1} parent=31 // pred_check
          %p181 = pneg %p34
        $region34: #{tpu_custom_call.1} parent=31 // pred_check_branch
          %183 = sbr.rel (%p181) target = $region36
        $region35: #{tpu_custom_call.1} parent=31 // pred_region
          %p184 = scmp.lt.s32.totalorder %s14, 1
          %s185 = scalar_select %p184, %s14, 1
          %s186 = smul.addr %s185, 10
          %s187 = smul.addr %s186, 8
          %s188 = scalar_lea.vmem %s0, %s187
        $region36: #{tpu_custom_call.1} parent=31 // pred_fallthru
          _
      $region32: #{tpu_custom_call.1} parent=5 // pred_fallthru
        _
      %p189 = scmp.le.s32.totalorder 1, %s14
      %p190 = scmp.lt.s32.totalorder %s14, 3
      %p191 = pnand %p189, %p190
      %p192 = pneg %p191
      // Predicated region
      $region37: #{tpu_custom_call.1} parent=5 // pred_check
        _
      $region38: #{tpu_custom_call.1} parent=5 // pred_check_branch
        %194 = sbr.rel (%p191) target = $region40
      $region39: #{tpu_custom_call.1} parent=5 // pred_region
        %s195 = ssub.s32 %s14, 1
        %p196 = scmp.lt.s32.totalorder %s19, 1
        %s197 = scalar_select %p196, %s19, 1
        %s198 = smul.addr %s197, 10
        %s199 = smul.addr %s198, 8
        %s200 = scalar_lea.vmem %s0, %s199
        %p201 = pneg %p40
        %p202 = pneg %p37
        %p203 = pneg %p61
        %p204 = pneg %p58
        %p205 = pneg %p82
        %p206 = pneg %p79
        %p207 = pneg %p103
        %p208 = pneg %p100
        %p209 = pneg %p124
        %p210 = pneg %p121
        %p211 = pneg %p150
        %p212 = pneg %p147
        %s213 = sand.u32 %s137, 1
        %s214 = scalar_lea.sflag [#allocation3], %s213
        %s215 = sand.u32 %s137, 1
        %s216 = smul.addr %s215, 8
        %s217 = scalar_lea.vmem [#allocation2], %s216
        %p218 = scmp.lt.s32.totalorder %s19, 1
        %s219 = scalar_select %p218, %s19, 1
        %s220 = smul.addr %s219, 10
        %s221 = smul.addr %s220, 8
        %s222 = scalar_lea.vmem %s0, %s221
        %v223 = vld [vmem:[%s222] sm:$0xff]
        %v224 = vld [vmem:[%s222 + $0x8] sm:$0xff]
        %v225 = vld [vmem:[%s222 + $0x10] sm:$0xff]
        %v226 = vld [vmem:[%s222 + $0x18] sm:$0xff]
        %v227 = vld [vmem:[%s222 + $0x20] sm:$0xff]
        %v228 = vld [vmem:[%s222 + $0x28] sm:$0xff]
        %v229 = vld [vmem:[%s222 + $0x30] sm:$0xff]
        %v230 = vld [vmem:[%s222 + $0x38] sm:$0xff]
        %v231 = vld [vmem:[%s222 + $0x40] sm:$0xf]
        %v232 = vld [vmem:[%s222 + $0x48] sm:$0xf]
        %v233 = vld [vmem:[%s1] sm:$0xff]
        %v234 = vld [vmem:[%s1 + $0x8] sm:$0xff]
        %v235 = vld [vmem:[%s2] sm:$0xff]
        %v236 = vld [vmem:[%s2 + $0x8] sm:$0xff]
        %238 = vset.pattern.permute.xlu0 0
        %239 = vperm.xlu0 %238, %v235
        %v240 = vpop.permute.xlu0 %239
        %243 = vset.pattern.permute.xlu0 0
        %244 = vperm.xlu0 %243, %v236
        %v245 = vpop.permute.xlu0 %244
        %vm247 = vcmask 293888
        %v249 = vsel %vm247, %v233, 0
        %v252 = vsel %vm247, %v234, 0
        %vm254 = vcmask 1043456
        %v256 = vsel %vm254, %v231, 0
        %v259 = vsel %vm254, %v232, 0
        %261 = vmatprep.subr.mxu0 0.0
        %262 = vmatpush1.msra.mxu0 0.0
        %263 = vmatprep.subr.mxu0 0.0
        %264 = vmatpush1.msra.mxu0 0.0
        %265 = vmatprep.subr.mxu0 0.0
        %266 = vmatpush1.msra.mxu0 0.0
        %267 = vmatprep.subr.mxu0 0.0
        %268 = vmatpush1.msra.mxu0 0.0
        %269 = vmatprep.subr.mxu0 0.0
        %270 = vmatpush1.msra.mxu0 0.0
        %271 = vmatprep.subr.mxu0 0.0
        %272 = vmatpush1.msra.mxu0 0.0
        %273 = vmatprep.subr.mxu0 0.0
        %274 = vmatpush1.msra.mxu0 0.0
        %275 = vmatprep.subr.mxu0 0.0
        %276 = vmatpush1.msra.mxu0 0.0
        %277 = vmatprep.subr.mxu0 0.0
        %278 = vmatpush1.msra.mxu0 0.0
        %279 = vmatprep.subr.mxu0 0.0
        %280 = vmatpush1.msra.mxu0 0.0
        %281 = vmatprep.subr.mxu0 0.0
        %282 = vmatpush1.msra.mxu0 0.0
        %283 = vmatprep.subr.mxu0 %v259
        %284 = vmatpush1.msra.mxu0 %v256
        %285 = vmatprep.subr.mxu0 %v230
        %286 = vmatpush1.msra.mxu0 %v229
        %287 = vmatprep.subr.mxu0 %v228
        %288 = vmatpush1.msra.mxu0 %v227
        %289 = vmatprep.subr.mxu0 %v226
        %290 = vmatpush1.msra.mxu0 %v225
        %291 = vmatprep.subr.mxu0 %v224
        %292 = vmatpush1.msra.mxu0 %v223
        %293 = vmatprep.subr.mxu0 0.0
        %294 = vmatpush2.msra.mxu0 0.0
        %295 = vmatprep.subr.mxu0 0.0
        %296 = vmatpush2.msra.mxu0 0.0
        %297 = vmatprep.subr.mxu0 0.0
        %298 = vmatpush2.msra.mxu0 0.0
        %299 = vmatprep.subr.mxu0 0.0
        %300 = vmatpush2.msra.mxu0 0.0
        %301 = vmatprep.subr.mxu0 0.0
        %302 = vmatpush2.msra.mxu0 0.0
        %303 = vmatprep.subr.mxu0 0.0
        %304 = vmatpush2.msra.mxu0 0.0
        %305 = vmatprep.subr.mxu0 0.0
        %306 = vmatpush2.msra.mxu0 0.0
        %307 = vmatprep.subr.mxu0 0.0
        %308 = vmatpush2.msra.mxu0 0.0
        %309 = vmatprep.subr.mxu0 0.0
        %310 = vmatpush2.msra.mxu0 0.0
        %311 = vmatprep.subr.mxu0 0.0
        %312 = vmatpush2.msra.mxu0 0.0
        %313 = vmatprep.subr.mxu0 0.0
        %314 = vmatpush2.msra.mxu0 0.0
        %315 = vmatprep.subr.mxu0 0.0
        %316 = vmatpush2.msra.mxu0 0.0
        %317 = vmatprep.subr.mxu0 0.0
        %318 = vmatpush2.msra.mxu0 0.0
        %319 = vmatprep.subr.mxu0 0.0
        %320 = vmatpush2.msra.mxu0 0.0
        %321 = vmatprep.subr.mxu0 0.0
        %322 = vmatpush2.msra.mxu0 0.0
        %323 = vmatprep.subr.mxu0 0.0
        %324 = vmatpush2.msra.mxu0 0.0
        %325 = vmatprep.mubr.f32.mxu0 0.0
        %326 = vmatmul.mubr.f32.gmra.mxu0 %v249
        %v327 = vpop.f32.mrf.mxu0
        %v328 = vadd.f32 %v240, %v327
        %v329 = vpop.f32.mrf.mxu0
        %v330 = vadd.f32 %v240, %v329
        %331 = vmatprep.mubr.f32.mxu0 0.0
        %332 = vmatmul.mubr.f32.gmra.mxu0 %v252
        %v333 = vpop.f32.mrf.mxu0
        %v334 = vadd.f32 %v245, %v333
        %v335 = vpop.f32.mrf.mxu0
        %v336 = vadd.f32 %v245, %v335
        %337 = vdwg.mxu0
        %v338 = vxor.u32 %v328, 2147483648
        %v339 = vxor.u32 %v330, 2147483648
        %v340 = vxor.u32 %v334, 2147483648
        %v341 = vxor.u32 %v336, 2147483648
        %v342 = vmul.f32 %v338, 1.442695
        %v343 = vpow.pop %v342
        %v344 = vmul.f32 %v339, 1.442695
        %v345 = vpow.pop %v344
        %v346 = vmul.f32 %v340, 1.442695
        %v347 = vpow.pop %v346
        %v348 = vmul.f32 %v341, 1.442695
        %v349 = vpow.pop %v348
        %v350 = vadd.f32 %v343, 1.0
        %v351 = vadd.f32 %v345, 1.0
        %v352 = vadd.f32 %v347, 1.0
        %v353 = vadd.f32 %v349, 1.0
        %v354 = vrcp.pop %v350
        %v355 = vmul.f32 1.0, %v354
        %v356 = vrcp.pop %v351
        %v357 = vmul.f32 1.0, %v356
        %v358 = vrcp.pop %v352
        %v359 = vmul.f32 1.0, %v358
        %v360 = vrcp.pop %v353
        %v361 = vmul.f32 1.0, %v360
        %v362 = vmul.f32 %v328, %v355
        %v363 = vmul.f32 %v330, %v357
        %v364 = vmul.f32 %v334, %v359
        %v365 = vmul.f32 %v336, %v361
        %v366 = vld [vmem:[%s3] sm:$0xf]
        %v367 = vld [vmem:[%s4] sm:$0xf]
        %369 = vset.pattern.permute.xlu0 0
        %370 = vperm.xlu0 %369, %v367
        %v371 = vpop.permute.xlu0 %370
        %vm373 = vcmask 130048
        %v375 = vsel %vm373, %v366, 0
        %377 = vmatprep.subr.mxu0 0.0
        %378 = vmatpush1.msra.mxu0 0.0
        %379 = vmatprep.subr.mxu0 0.0
        %380 = vmatpush1.msra.mxu0 0.0
        %381 = vmatprep.subr.mxu0 0.0
        %382 = vmatpush1.msra.mxu0 0.0
        %383 = vmatprep.subr.mxu0 0.0
        %384 = vmatpush1.msra.mxu0 0.0
        %385 = vmatprep.subr.mxu0 0.0
        %386 = vmatpush1.msra.mxu0 0.0
        %387 = vmatprep.subr.mxu0 0.0
        %388 = vmatpush1.msra.mxu0 0.0
        %389 = vmatprep.subr.mxu0 0.0
        %390 = vmatpush1.msra.mxu0 0.0
        %391 = vmatprep.subr.mxu0 0.0
        %392 = vmatpush1.msra.mxu0 0.0
        %393 = vmatprep.subr.mxu0 0.0
        %394 = vmatpush1.msra.mxu0 0.0
        %395 = vmatprep.subr.mxu0 0.0
        %396 = vmatpush1.msra.mxu0 0.0
        %397 = vmatprep.subr.mxu0 0.0
        %398 = vmatpush1.msra.mxu0 0.0
        %399 = vmatprep.subr.mxu0 0.0
        %400 = vmatpush1.msra.mxu0 0.0
        %401 = vmatprep.subr.mxu0 0.0
        %402 = vmatpush1.msra.mxu0 0.0
        %403 = vmatprep.subr.mxu0 0.0
        %404 = vmatpush1.msra.mxu0 0.0
        %405 = vmatprep.subr.mxu0 %v365
        %406 = vmatpush1.msra.mxu0 %v364
        %407 = vmatprep.subr.mxu0 %v363
        %408 = vmatpush1.msra.mxu0 %v362
        %409 = vmatprep.subr.mxu0 0.0
        %410 = vmatpush2.msra.mxu0 0.0
        %411 = vmatprep.subr.mxu0 0.0
        %412 = vmatpush2.msra.mxu0 0.0
        %413 = vmatprep.subr.mxu0 0.0
        %414 = vmatpush2.msra.mxu0 0.0
        %415 = vmatprep.subr.mxu0 0.0
        %416 = vmatpush2.msra.mxu0 0.0
        %417 = vmatprep.subr.mxu0 0.0
        %418 = vmatpush2.msra.mxu0 0.0
        %419 = vmatprep.subr.mxu0 0.0
        %420 = vmatpush2.msra.mxu0 0.0
        %421 = vmatprep.subr.mxu0 0.0
        %422 = vmatpush2.msra.mxu0 0.0
        %423 = vmatprep.subr.mxu0 0.0
        %424 = vmatpush2.msra.mxu0 0.0
        %425 = vmatprep.subr.mxu0 0.0
        %426 = vmatpush2.msra.mxu0 0.0
        %427 = vmatprep.subr.mxu0 0.0
        %428 = vmatpush2.msra.mxu0 0.0
        %429 = vmatprep.subr.mxu0 0.0
        %430 = vmatpush2.msra.mxu0 0.0
        %431 = vmatprep.subr.mxu0 0.0
        %432 = vmatpush2.msra.mxu0 0.0
        %433 = vmatprep.subr.mxu0 0.0
        %434 = vmatpush2.msra.mxu0 0.0
        %435 = vmatprep.subr.mxu0 0.0
        %436 = vmatpush2.msra.mxu0 0.0
        %437 = vmatprep.subr.mxu0 0.0
        %438 = vmatpush2.msra.mxu0 0.0
        %439 = vmatprep.subr.mxu0 0.0
        %440 = vmatpush2.msra.mxu0 0.0
        %441 = vmatprep.mubr.f32.mxu0 0.0
        %442 = vmatmul.mubr.f32.gmra.mxu0 %v375
        %v443 = vpop.f32.mrf.mxu0
        %v444 = vadd.f32 %v371, %v443
        %v445 = vpop.f32.mrf.mxu0
        %v446 = vadd.f32 %v371, %v445
        %447 = vdwg.mxu0
        %v448 = vadd.f32 %v444, %v227
        %v449 = vadd.f32 %v446, %v228
        %v452 = vcombine.low %v448, %v449
        %454 = vst [vmem:[%s217] sm:$0xff] %v452
        %s455 = sand.u32 %s137, 1
        %s456 = scalar_lea.sflag [#allocation3], %s455
        %s457 = sand.u32 %s137, 1
        %s458 = smul.addr %s457, 8
        %s459 = scalar_lea.vmem [#allocation2], %s458
        // Predicated region
        $region41: #{tpu_custom_call.1} parent=39 // pred_check
          %p460 = pneg %p147
        $region42: #{tpu_custom_call.1} parent=39 // pred_check_branch
          %462 = sbr.rel (%p460) target = $region44
        $region43: #{tpu_custom_call.1} parent=39 // pred_region
          %s464 = ssub.s32 128, 128
          %465 = vsyncadd %s456, %s464
          %s466 = smul.addr %s19, 2
          %s467 = smul.addr %s466, 64
          %s468 = scalar_lea.hbm %s5, %s467
          %s470 = sshll.u32 %s459, 4
          %s471 = int_to_ptr.vmem [resolvable:$true] %s470
          %473 = dma.vmem_to_hbm [thread:$0]  %s471, 128, %s468, %s456
        $region44: #{tpu_custom_call.1} parent=39 // pred_fallthru
          _
      $region40: #{tpu_custom_call.1} parent=5 // pred_fallthru
        _
      %p474 = scmp.le.s32.totalorder 2, %s14
      // Predicated region
      $region45: #{tpu_custom_call.1} parent=5 // pred_check
        %p475 = pneg %p474
      $region46: #{tpu_custom_call.1} parent=5 // pred_check_branch
        %477 = sbr.rel (%p475) target = $region48
      $region47: #{tpu_custom_call.1} parent=5 // pred_region
        %s478 = ssub.s32 %s14, 2
        // Predicated region
        $region49: #{tpu_custom_call.1} parent=47 // pred_check
          %p479 = pneg %p153
        $region50: #{tpu_custom_call.1} parent=47 // pred_check_branch
          %481 = sbr.rel (%p479) target = $region52
        $region51: #{tpu_custom_call.1} parent=47 // pred_region
          %s482 = sand.u32 %s138, 1
          %s483 = scalar_lea.sflag [#allocation3], %s482
          %s484 = sand.u32 %s138, 1
          %s485 = smul.addr %s484, 8
          %s486 = scalar_lea.vmem [#allocation2], %s485
          %487 = dma.done %s483, 128
        $region52: #{tpu_custom_call.1} parent=47 // pred_fallthru
          _
      $region48: #{tpu_custom_call.1} parent=5 // pred_fallthru
        _
    $region6: #{tpu_custom_call.1} parent=1 // loop_footer
      %s18 = sadd.s32 1, %s14
    $region7: #{tpu_custom_call.1} parent=1 // loop_footer_branch
      %13 = sbr.rel target = $region3
    $region8: #{tpu_custom_call.1} parent=1 // loop_exit
      _
    %488 = vsyncpa [#allocation3], 1
    %s489 = scalar_lea.sflag [#allocation3], 1
    %490 = vsyncpa %s489, 1

</llo_original>
